<compile_context>
chip_gen: v7x
topology: tpu7x:2x2x1
jax: 0.10.0
libtpu: 0.0.40
codegen_flags: <defaults>
</compile_context>

<pallas_src>
import functools

import jax
import jax.numpy as jnp
from jax.experimental import pallas as pl
from jax.experimental.pallas import tpu as pltpu


def _round_up(x: int, m: int) -> int:
    return (x + m - 1) // m * m


def _ce_loss_kernel(pred_t_ref, tgt_ref, out_ref, *, label_smoothing: float, batch_size: int):
    """Cross-entropy (+ optional label smoothing) over one batch tile.

    pred_t_ref: [C, TB] logits in native dtype (batch on lanes, classes on sublanes).
    tgt_ref   : [1, TB] int32 class indices.
    out_ref   : [1, 1]  f32 running sum; becomes the batch-mean loss on the last step.
    """
    step = pl.program_id(0)

    @pl.when(step == 0)
    def _init():
        out_ref[...] = jnp.zeros_like(out_ref)

    logits = pred_t_ref[...].astype(jnp.float32)                       # [C, TB]
    tgt = tgt_ref[...]                                                 # [1, TB] int32
    C, TB = logits.shape

    # Numerically stable log-sum-exp over the class (sublane) axis.
    m = jnp.max(logits, axis=0, keepdims=True)                         # [1, TB]
    shifted = logits - m                                               # [C, TB]
    lse = jnp.log(jnp.sum(jnp.exp(shifted), axis=0, keepdims=True))    # [1, TB]

    # shifted[target] via one-hot compare+select (VPU) + sublane reduce (XLU); no MXU.
    class_ids = jax.lax.broadcasted_iota(jnp.int32, (C, TB), dimension=0)
    tgt_shifted = jnp.sum(jnp.where(class_ids == tgt, shifted, 0.0),
                          axis=0, keepdims=True)                       # [1, TB]

    nll = lse - tgt_shifted                                            # [1, TB]
    eps = float(label_smoothing)
    if eps > 0.0:
        # torch: loss_i = (1-eps)*nll_i + eps*mean_j(-logp_ij), and
        # mean_j(-logp_ij) = lse_i - mean_j(shifted_ij).
        smooth = lse - jnp.mean(shifted, axis=0, keepdims=True)        # [1, TB]
        per_sample = (1.0 - eps) * nll + eps * smooth
    else:
        per_sample = nll

    # Mask batch-padding columns of the (possibly ragged) last tile.
    col = jax.lax.broadcasted_iota(jnp.int32, (1, TB), dimension=1) + step * TB
    per_sample = jnp.where(col < batch_size, per_sample, 0.0)

    out_ref[...] += jnp.sum(per_sample, axis=1, keepdims=True)

    @pl.when(step == pl.num_programs(0) - 1)
    def _finalize():
        out_ref[...] = out_ref[...] * jnp.float32(1.0 / batch_size)


def pointnet_v2_classification_loss(pred, target, trans_feat=None,
                                     label_smoothing: float = 0.0,
                                     block_b: int = 1024):
    """Mirrors get_loss.forward(pred, target, trans_feat) -> scalar mean loss.

    pred   : [B, C] class logits, any float dtype (kept native; cast to f32 in-kernel).
    target : [B] (or [B, 1]) integer class indices.
    trans_feat: unused, exactly as in the reference module.
    block_b: batch-tile rows per grid step (rounded to a multiple of 128).  Use >=512 on
             v5e/v6e and >=1024-2048 on v7x for large training batches.
    """
    del trans_feat  # unused by the reference module's loss
    B, C = pred.shape

    tb = _round_up(min(block_b, _round_up(B, 128)), 128)
    b_pad = _round_up(B, tb)

    # Lane-dense layout: batch on the 128-lane axis, classes on sublanes.  (In a fused
    # classifier-head kernel the producer would emit this layout directly; here the
    # transpose/pad is wrapper plumbing and carries NO dtype cast.)
    pred_t = jnp.swapaxes(pred, 0, 1)                                  # [C, B], native dtype
    tgt = target.reshape(-1).astype(jnp.int32)                         # [B]
    if b_pad != B:
        pred_t = jnp.pad(pred_t, ((0, 0), (0, b_pad - B)))
        tgt = jnp.pad(tgt, (0, b_pad - B))                             # padded cols masked in-kernel
    tgt2d = tgt.reshape(1, b_pad)

    kernel = functools.partial(_ce_loss_kernel,
                               label_smoothing=float(label_smoothing),
                               batch_size=B)
    out = pl.pallas_call(
        kernel,
        out_shape=jax.ShapeDtypeStruct((1, 1), jnp.float32),
        grid_spec=pltpu.PrefetchScalarGridSpec(
            num_scalar_prefetch=0,
            grid=(b_pad // tb,),
            in_specs=[
                pl.BlockSpec((C, tb), lambda i: (0, i)),
                pl.BlockSpec((1, tb), lambda i: (0, i)),
            ],
            out_specs=pl.BlockSpec((1, 1), lambda i: (0, 0)),
        ),
        compiler_params=pltpu.CompilerParams(
            dimension_semantics=("arbitrary",)),  # reduction axis -> resident accumulator
    )(pred_t, tgt2d)
    return out[0, 0]


def _reference_loss(pred, target, label_smoothing=0.0):
    """Pure-JAX reference (torch CrossEntropyLoss semantics) for sanity checking."""
    logp = jax.nn.log_softmax(pred.astype(jnp.float32), axis=-1)
    B = pred.shape[0]
    nll = -logp[jnp.arange(B), target]
    if label_smoothing > 0.0:
        per = (1.0 - label_smoothing) * nll + label_smoothing * (-jnp.mean(logp, axis=-1))
    else:
        per = nll
    return jnp.mean(per)


if __name__ == "__main__":
    key = jax.random.PRNGKey(0)
    k1, k2, k3, k4 = jax.random.split(key, 4)

    # Small inference-style shapes (ModelNet40-style: 40 classes).
    B1, C = 8, 40
    pred1 = jax.random.normal(k1, (B1, C), dtype=jnp.float32)           # class logits
    tgt1 = jax.random.randint(k2, (B1,), 0, C, dtype=jnp.int32)         # class indices
    trans_feat = jax.random.normal(k3, (B1, 3, 3), dtype=jnp.float32)   # unused by the loss

    loss1 = jax.block_until_ready(
        pointnet_v2_classification_loss(pred1, tgt1, trans_feat, label_smoothing=0.0))
    ref1 = jax.block_until_ready(_reference_loss(pred1, tgt1, 0.0))
    assert jnp.allclose(loss1, ref1, atol=1e-4, rtol=1e-4), (loss1, ref1)

    # Larger batch exercising multi-tile accumulation, ragged-tile masking and label
    # smoothing, with logits kept in native bf16 (cast to f32 inside the kernel only).
    B2 = 200
    pred2 = jax.random.normal(k4, (B2, C), dtype=jnp.float32).astype(jnp.bfloat16)
    tgt2 = jax.random.randint(k2, (B2,), 0, C, dtype=jnp.int32)
    loss2 = jax.block_until_ready(
        pointnet_v2_classification_loss(pred2, tgt2, None, label_smoothing=0.1, block_b=128))
    ref2 = jax.block_until_ready(_reference_loss(pred2.astype(jnp.float32), tgt2, 0.1))
    assert jnp.allclose(loss2, ref2, atol=1e-4, rtol=1e-4), (loss2, ref2)

    print("KERNEL_OK")
</pallas_src>

<mosaic_0001>
module attributes {stable_mosaic.version = 11 : i64} {
  func.func @_ce_loss_kernel(%arg0: i32, %arg1: memref<40x128xf32, #tpu.memory_space<vmem>>, %arg2: memref<1x128xi32, #tpu.memory_space<vmem>>, %arg3: memref<1x1xf32, #tpu.memory_space<vmem>>) attributes {dimension_semantics = [#tpu.dimension_semantics<arbitrary>], iteration_bounds = array<i64: 1>, scalar_prefetch = 0 : i64, scratch_operands = 0 : i64, tpu.core_type = #tpu.core_type<tc>, window_params = [{transform_indices = @transform_0, window_bounds = array<i64: 40, 128>}, {transform_indices = @transform_1, window_bounds = array<i64: 1, 128>}, {pipeline_mode = #tpu.pipeline_mode<synchronous>, transform_indices = @transform_2, window_bounds = array<i64: 1, 1>}]} {
    %c0_i32 = arith.constant 0 : i32
    %0 = arith.cmpi eq, %arg0, %c0_i32 : i32
    %1 = arith.extui %0 : i1 to i32
    %c0_i32_0 = arith.constant 0 : i32
    %2 = arith.cmpi ne, %1, %c0_i32_0 : i32
    scf.if %2 {
      %cst_15 = arith.constant 0.000000e+00 : f32
      %37 = vector.broadcast %cst_15 : f32 to vector<1x1xf32>
      %c0_16 = arith.constant 0 : index
      %c0_17 = arith.constant 0 : index
      %38 = vector.load %arg3[%c0_16, %c0_17] : memref<1x1xf32, #tpu.memory_space<vmem>>, vector<1x1xf32>
      tpu.vector_store %arg3[%c0_16, %c0_17], %37 {strides = array<i32>} : memref<1x1xf32, #tpu.memory_space<vmem>>, vector<1x1xf32>,
    } else {
    }
    %c0 = arith.constant 0 : index
    %c0_1 = arith.constant 0 : index
    %3 = vector.load %arg1[%c0, %c0_1] : memref<40x128xf32, #tpu.memory_space<vmem>>, vector<40x128xf32>
    %c0_2 = arith.constant 0 : index
    %c0_3 = arith.constant 0 : index
    %4 = vector.load %arg2[%c0_2, %c0_3] : memref<1x128xi32, #tpu.memory_space<vmem>>, vector<1x128xi32>
    %cst = arith.constant dense<0xFF800000> : vector<128xf32>
    %5 = vector.multi_reduction <maximumf>, %3, %cst [0] : vector<40x128xf32> to vector<128xf32>
    %6 = vector.shape_cast %5 : vector<128xf32> to vector<1x128xf32>
    %7 = vector.broadcast %6 : vector<1x128xf32> to vector<40x128xf32>
    %8 = arith.subf %3, %7 : vector<40x128xf32>
    %9 = math.exp %8 : vector<40x128xf32>
    %cst_4 = arith.constant dense<0.000000e+00> : vector<128xf32>
    %10 = vector.multi_reduction <add>, %9, %cst_4 [0] : vector<40x128xf32> to vector<128xf32>
    %11 = vector.shape_cast %10 : vector<128xf32> to vector<1x128xf32>
    %12 = math.log %11 : vector<1x128xf32>
    %13 = tpu.iota {dimensions = array<i32: 0>} : vector<40x128xi32>
    %14 = vector.broadcast %4 : vector<1x128xi32> to vector<40x128xi32>
    %15 = arith.cmpi eq, %13, %14 : vector<40x128xi32>
    %cst_5 = arith.constant 0.000000e+00 : f32
    %16 = vector.broadcast %cst_5 : f32 to vector<40x128xf32>
    %17 = arith.select %15, %8, %16 : vector<40x128xi1>, vector<40x128xf32>
    %cst_6 = arith.constant dense<0.000000e+00> : vector<128xf32>
    %18 = vector.multi_reduction <add>, %17, %cst_6 [0] : vector<40x128xf32> to vector<128xf32>
    %19 = vector.shape_cast %18 : vector<128xf32> to vector<1x128xf32>
    %20 = arith.subf %12, %19 : vector<1x128xf32>
    %21 = tpu.iota {dimensions = array<i32: 1>} : vector<1x128xi32>
    %c128_i32 = arith.constant 128 : i32
    %22 = arith.muli %arg0, %c128_i32 : i32
    %23 = vector.broadcast %22 : i32 to vector<1x128xi32>
    %24 = arith.addi %21, %23 : vector<1x128xi32>
    %c8_i32 = arith.constant 8 : i32
    %25 = vector.broadcast %c8_i32 : i32 to vector<1x128xi32>
    %26 = arith.cmpi slt, %24, %25 : vector<1x128xi32>
    %cst_7 = arith.constant 0.000000e+00 : f32
    %27 = vector.broadcast %cst_7 : f32 to vector<1x128xf32>
    %28 = arith.select %26, %20, %27 : vector<1x128xi1>, vector<1x128xf32>
    %c0_8 = arith.constant 0 : index
    %c0_9 = arith.constant 0 : index
    %29 = vector.load %arg3[%c0_8, %c0_9] : memref<1x1xf32, #tpu.memory_space<vmem>>, vector<1x1xf32>
    %cst_10 = arith.constant dense<0.000000e+00> : vector<1xf32>
    %30 = vector.multi_reduction <add>, %28, %cst_10 [1] : vector<1x128xf32> to vector<1xf32>
    %31 = vector.shape_cast %30 : vector<1xf32> to vector<1x1xf32>
    %32 = arith.addf %29, %31 : vector<1x1xf32>
    %c0_11 = arith.constant 0 : index
    %c0_12 = arith.constant 0 : index
    %33 = vector.load %arg3[%c0_11, %c0_12] : memref<1x1xf32, #tpu.memory_space<vmem>>, vector<1x1xf32>
    tpu.vector_store %arg3[%c0_11, %c0_12], %32 {strides = array<i32>} : memref<1x1xf32, #tpu.memory_space<vmem>>, vector<1x1xf32>,
    %c0_i32_13 = arith.constant 0 : i32
    %34 = arith.cmpi eq, %arg0, %c0_i32_13 : i32
    %35 = arith.extui %34 : i1 to i32
    %c0_i32_14 = arith.constant 0 : i32
    %36 = arith.cmpi ne, %35, %c0_i32_14 : i32
    scf.if %36 {
      %c0_15 = arith.constant 0 : index
      %c0_16 = arith.constant 0 : index
      %37 = vector.load %arg3[%c0_15, %c0_16] : memref<1x1xf32, #tpu.memory_space<vmem>>, vector<1x1xf32>
      %cst_17 = arith.constant 1.250000e-01 : f32
      %38 = vector.broadcast %cst_17 : f32 to vector<1x1xf32>
      %39 = arith.mulf %37, %38 : vector<1x1xf32>
      %c0_18 = arith.constant 0 : index
      %c0_19 = arith.constant 0 : index
      %40 = vector.load %arg3[%c0_18, %c0_19] : memref<1x1xf32, #tpu.memory_space<vmem>>, vector<1x1xf32>
      tpu.vector_store %arg3[%c0_18, %c0_19], %39 {strides = array<i32>} : memref<1x1xf32, #tpu.memory_space<vmem>>, vector<1x1xf32>,
    } else {
    }
    return
  }
  func.func @transform_0(%arg0: i32) -> (i32, i32) {
    %c0_i32 = arith.constant 0 : i32
    %c0_i32_0 = arith.constant 0 : i32
    return %c0_i32, %arg0 : i32, i32
  }
  func.func @transform_1(%arg0: i32) -> (i32, i32) {
    %c0_i32 = arith.constant 0 : i32
    %c0_i32_0 = arith.constant 0 : i32
    return %c0_i32, %arg0 : i32, i32
  }
  func.func @transform_2(%arg0: i32) -> (i32, i32) {
    %c0_i32 = arith.constant 0 : i32
    %c0_i32_0 = arith.constant 0 : i32
    %c0_i32_1 = arith.constant 0 : i32
    return %c0_i32, %c0_i32_0 : i32, i32
  }
}

</mosaic_0001>

<llo_original>
// kernel: tpu_custom_call.1
$region0: #{tpu_custom_call.1}
  #allocation0 [shape = 'u32[]', space=smem, size = 0x4, offset = 0x4, fixed_abs, tag = 'smem constant byte address 0x4 - core index']
  #allocation1 [shape = 'u32[144,128]{1,0:T(1,128)}', space=vmem, size = 0x12000, scoped, tag = 'internal scratch']
  %s0 = inlined_call_operand.hbm [shape: f32[40,128], index: 0, kind: input, shape index: {}]
  %s1 = inlined_call_operand.vmem [shape: s32[1,128], index: 1, kind: input, shape index: {}]
  %s2 = inlined_call_operand.hbm [shape: f32[1,1], index: 2, kind: output, shape index: {}]
  %s3 = sld [smem:[#allocation0]]
  $region30: #{tpu_custom_call.1} parent=0
    _
  %s5 = ssub.s32 1, %s3
  %s6 = scalar_select 0, %s5, %s3
  $region1: #{tpu_custom_call.1} parent=0
    #allocation2 [shape = 'u8[20480]{0}', space=vmem, size = 0x5000, scoped, tag = 'input window, operand 0, single buffered']
    #allocation3 [shape = 's32[1]{0}', space=sflag, size = 0x4, scoped, tag = 'scoped memory for tpu_custom_call.1']
    #allocation4 [shape = 's32[1]{0}', space=sflag, size = 0x4, scoped, tag = 'scoped memory for tpu_custom_call.1']
    #allocation5 [shape = 'u8[512]{0}', space=vmem, size = 0x400, scoped, tag = 'output window, operand 0, single buffered']
    %7 = vsyncpa [#allocation3], 0
    %8 = vsyncpa [#allocation4], 0
    // Predicated region
    $region2: #{tpu_custom_call.1} parent=1 // pred_check
      _
    $region3: #{tpu_custom_call.1} parent=1 // pred_check_branch
      %10 = sbr.rel (0) target = $region5
    $region4: #{tpu_custom_call.1} parent=1 // pred_region
      %s12 = ssub.s32 640, 640
      %13 = vsyncadd [#allocation3], %s12
      %s14 = sshll.u32 [#allocation2], 4
      %s15 = int_to_ptr.vmem [resolvable:$true] %s14
      %20 = dma.hbm_to_vmem [thread:$0]  %s0, 640, %s15, [#allocation3], 128, 128, 8
    $region5: #{tpu_custom_call.1} parent=1 // pred_fallthru
      _
    // Predicated region
    $region6: #{tpu_custom_call.1} parent=1 // pred_check
      _
    $region7: #{tpu_custom_call.1} parent=1 // pred_check_branch
      %22 = sbr.rel (0) target = $region9
    $region8: #{tpu_custom_call.1} parent=1 // pred_region
      _
    $region9: #{tpu_custom_call.1} parent=1 // pred_fallthru
      _
    // Predicated region
    $region10: #{tpu_custom_call.1} parent=1 // pred_check
      _
    $region11: #{tpu_custom_call.1} parent=1 // pred_check_branch
      %24 = sbr.rel (0) target = $region13
    $region12: #{tpu_custom_call.1} parent=1 // pred_region
      %25 = dma.done [#allocation3], 640
    $region13: #{tpu_custom_call.1} parent=1 // pred_fallthru
      _
    %p26 = scmp.eq.s32.totalorder 0, 0
    // Predicated region
    $region14: #{tpu_custom_call.1} parent=1 // pred_check
      %p27 = pneg %p26
    $region15: #{tpu_custom_call.1} parent=1 // pred_check_branch
      %29 = sbr.rel (%p27) target = $region17
    $region16: #{tpu_custom_call.1} parent=1 // pred_region
      %vm30 = vcmask 0
      %31 = vst.msk [vmem:[#allocation5] sm:$0x1] %vm30, 0.0
    $region17: #{tpu_custom_call.1} parent=1 // pred_fallthru
      _
    %v32 = vld [vmem:[#allocation2] sm:$0xff]
    %v33 = vld [vmem:[#allocation2 + $0x8] sm:$0xff]
    %v34 = vld [vmem:[#allocation2 + $0x10] sm:$0xff]
    %v35 = vld [vmem:[#allocation2 + $0x18] sm:$0xff]
    %v36 = vld [vmem:[#allocation2 + $0x20] sm:$0xff]
    %v37 = vld [vmem:[%s1] sm:$0x1]
    %v38 = vmax.f32 %v32, %v36
    %v39 = vmax.f32 %v38, %v33
    %v40 = vmax.f32 %v34, %v35
    %v41 = vmax.f32 %v39, %v40
    %v42 = vrot.slane %v41, 4
    %v43 = vmax.f32 %v41, %v42
    %v44 = vrot.slane %v43, 2
    %v45 = vmax.f32 %v43, %v44
    %v46 = vrot.slane %v45, 1
    %v47 = vmax.f32 %v45, %v46
    %v48 = vsub.f32 %v32, %v47
    %v49 = vsub.f32 %v33, %v47
    %v50 = vsub.f32 %v34, %v47
    %v51 = vsub.f32 %v35, %v47
    %v52 = vsub.f32 %v36, %v47
    %v53 = vmul.f32 %v48, 1.442695
    %v54 = vpow.pop %v53
    %v55 = vmul.f32 %v49, 1.442695
    %v56 = vpow.pop %v55
    %v57 = vmul.f32 %v50, 1.442695
    %v58 = vpow.pop %v57
    %v59 = vmul.f32 %v51, 1.442695
    %v60 = vpow.pop %v59
    %v61 = vmul.f32 %v52, 1.442695
    %v62 = vpow.pop %v61
    %v63 = vadd.f32 %v54, %v56
    %v64 = vadd.f32 %v63, %v58
    %v65 = vadd.f32 %v64, %v60
    %v66 = vadd.f32 %v65, %v62
    %v67 = vrot.slane %v66, 4
    %v68 = vadd.f32 %v66, %v67
    %v69 = vrot.slane %v68, 2
    %v70 = vadd.f32 %v68, %v69
    %v71 = vrot.slane %v70, 1
    %v72 = vadd.f32 %v70, %v71
    %v73 = vlog2.pop %v72
    %v74 = vmul.f32 %v73, 0.6931472
    %v75 = vlaneseq
    %v76 = vshrl.u32 %v75, 7
    %v77 = vadd.s32 %v76, 8
    %v78 = vadd.s32 %v76, 16
    %v79 = vadd.s32 %v76, 24
    %v80 = vadd.s32 %v76, 32
    %v81 = vlaneseq
    %v82 = vshrl.u32 %v81, 7
    %v83 = vsub.s32 0, %v82
    %v84 = vrot.slane %v37, %v83
    %vm85 = vcmp.eq.s32.totalorder %v76, %v84
    %vm86 = vcmp.eq.s32.totalorder %v77, %v84
    %vm87 = vcmp.eq.s32.totalorder %v78, %v84
    %vm88 = vcmp.eq.s32.totalorder %v79, %v84
    %vm89 = vcmp.eq.s32.totalorder %v80, %v84
    %v90 = vsel %vm85, %v48, 0.0
    %v91 = vsel %vm86, %v49, 0.0
    %v92 = vsel %vm87, %v50, 0.0
    %v93 = vsel %vm88, %v51, 0.0
    %v94 = vsel %vm89, %v52, 0.0
    %v95 = vadd.f32 %v90, %v91
    %v96 = vadd.f32 %v95, %v92
    %v97 = vadd.f32 %v96, %v93
    %v98 = vadd.f32 %v97, %v94
    %v99 = vrot.slane %v98, 4
    %v100 = vadd.f32 %v98, %v99
    %v101 = vrot.slane %v100, 2
    %v102 = vadd.f32 %v100, %v101
    %v103 = vrot.slane %v102, 1
    %v104 = vadd.f32 %v102, %v103
    %v105 = vsub.f32 %v74, %v104
    %v106 = vlaneseq
    %v107 = vand.u32 %v106, 127
    %s108 = smul.u32 0, 128
    %v109 = vstv %s108
    %v110 = vadd.s32 %v107, %v109
    %vm111 = vcmp.lt.s32.totalorder %v110, 8
    %v112 = vsel %vm111, %v105, 0.0
    %v113 = vld [vmem:[#allocation5] sm:$0x1]
    %114 = vadd.xlane.f32.xlu0 %v112
    %v115 = vpop.xlane.xlu0 %114
    %v116 = vadd.f32 %v113, %v115
    %vm117 = vcmask 0
    %118 = vst.msk [vmem:[#allocation5] sm:$0x1] %vm117, %v116
    // Predicated region
    $region18: #{tpu_custom_call.1} parent=1 // pred_check
      %p119 = pneg %p26
    $region19: #{tpu_custom_call.1} parent=1 // pred_check_branch
      %121 = sbr.rel (%p119) target = $region21
    $region20: #{tpu_custom_call.1} parent=1 // pred_region
      %v122 = vld [vmem:[#allocation5] sm:$0x1]
      %v123 = vmul.f32 %v122, 0.125
      %124 = vst.msk [vmem:[#allocation5] sm:$0x1] %vm117, %v123
    $region21: #{tpu_custom_call.1} parent=1 // pred_fallthru
      _
    // Predicated region
    $region22: #{tpu_custom_call.1} parent=1 // pred_check
      _
    $region23: #{tpu_custom_call.1} parent=1 // pred_check_branch
      %126 = sbr.rel (0) target = $region25
    $region24: #{tpu_custom_call.1} parent=1 // pred_region
      %s128 = ssub.s32 16, 16
      %129 = vsyncadd [#allocation4], %s128
      %s131 = sshll.u32 [#allocation5], 4
      %s132 = int_to_ptr.vmem [resolvable:$true] %s131
      %134 = dma.vmem_to_hbm [thread:$0]  %s132, 16, %s2, [#allocation4]
    $region25: #{tpu_custom_call.1} parent=1 // pred_fallthru
      _
    // Predicated region
    $region26: #{tpu_custom_call.1} parent=1 // pred_check
      _
    $region27: #{tpu_custom_call.1} parent=1 // pred_check_branch
      %136 = sbr.rel (0) target = $region29
    $region28: #{tpu_custom_call.1} parent=1 // pred_region
      %137 = dma.done [#allocation4], 16
    $region29: #{tpu_custom_call.1} parent=1 // pred_fallthru
      _
    %138 = vsyncpa [#allocation3], 1
    %139 = vsyncpa [#allocation4], 1

</llo_original>
